<compile_context>
chip_gen: v7x
topology: tpu7x:2x2x1
jax: 0.10.0
libtpu: 0.0.40
codegen_flags: <defaults>
</compile_context>

<pallas_src>
import functools

import jax
import jax.numpy as jnp
from jax import lax
from jax.experimental import pallas as pl
from jax.experimental.pallas import tpu as pltpu

LANE = 128             # vreg lane width
MAX_BLOCK_ROWS = 4096  # (4096, 128) f32 block = 2 MiB per input per buffer


def _fold_max(x, block_rows):
    # (block_rows, 128) -> (8, 128), sublane-aligned VPU-only fold.
    return jnp.max(x.reshape(block_rows // 8, 8, LANE), axis=0)


def _fold_sum(x, block_rows):
    return jnp.sum(x.reshape(block_rows // 8, 8, LANE), axis=0)


def _dispatch(accum, g, *, rows, block_rows, nb_per, nb_total, nslices):
    """Run `accum`, paying tail-mask VPU work only where it is needed.

      g <  last              -> full block, unmasked fast path
      g == last (partial)    -> masked (rows beyond `rows` carry garbage)
      g == last (no partial) -> full block, unmasked
      g >  last              -> duplicated (clamped) block of an uneven split: skip
    """
    partial = rows % block_rows              # static
    has_dups = nslices * nb_per != nb_total  # static
    last = nb_total - 1

    if partial == 0 and not has_dups:
        accum(masked=False)                  # hot path: zero tail-mask work
        return

    if partial:
        @pl.when(g < last)
        def _():
            accum(masked=False)

        @pl.when(g == last)
        def _():
            accum(masked=True)
    else:
        @pl.when(g <= last)
        def _():
            accum(masked=False)


def _max_diff_kernel(p_ref, t_ref, max_ref, *,
                     rows, block_rows, nb_per, nb_total, nslices):
    """Per-slice streaming max(|pred - target|) into an (8,128) resident output block."""
    s = pl.program_id(0)
    i = pl.program_id(1)
    g = s * nb_per + i            # un-clamped global block index

    @pl.when(i == 0)
    def _():
        max_ref[...] = jnp.zeros_like(max_ref)

    def accum(masked):
        diff = jnp.abs(p_ref[...].astype(jnp.float32) -
                       t_ref[...].astype(jnp.float32))
        if masked:
            row_ids = lax.broadcasted_iota(jnp.int32, (block_rows, LANE), 0)
            diff = jnp.where(g * block_rows + row_ids < rows, diff, 0.0)
        max_ref[...] = jnp.maximum(max_ref[...], _fold_max(diff, block_rows))

    _dispatch(accum, g, rows=rows, block_rows=block_rows,
              nb_per=nb_per, nb_total=nb_total, nslices=nslices)


def _berhu_sum_kernel(params_ref, p_ref, t_ref, loss_ref, cnt_ref, *,
                      rows, block_rows, nb_per, nb_total, nslices):
    """Per-slice streaming sum(berhu * mask) and sum(mask) into (8,128) resident blocks."""
    s = pl.program_id(0)
    i = pl.program_id(1)
    g = s * nb_per + i

    @pl.when(i == 0)
    def _():
        loss_ref[...] = jnp.zeros_like(loss_ref)
        cnt_ref[...] = jnp.zeros_like(cnt_ref)

    # Scalars precomputed in the wrapper: c, c^2, 1/(2c)  (no per-element divide).
    c = params_ref[0]
    c2 = params_ref[1]
    inv_2c = params_ref[2]

    def accum(masked):
        p = p_ref[...].astype(jnp.float32)
        t = t_ref[...].astype(jnp.float32)
        diff = jnp.abs(p - t)
        mask = t > 0.0
        if masked:
            row_ids = lax.broadcasted_iota(jnp.int32, (block_rows, LANE), 0)
            mask = jnp.logical_and(mask, g * block_rows + row_ids < rows)
        berhu = jnp.where(diff <= c, diff, (diff * diff + c2) * inv_2c)
        # where-based masking so garbage in a partial last block can never leak inf/NaN.
        contrib = jnp.where(mask, berhu, 0.0)
        loss_ref[...] += _fold_sum(contrib, block_rows)
        cnt_ref[...] += _fold_sum(mask.astype(jnp.float32), block_rows)

    _dispatch(accum, g, rows=rows, block_rows=block_rows,
              nb_per=nb_per, nb_total=nb_total, nslices=nslices)


def berhu_loss(pred, target, threshold=0.2):
    """Pallas implementation of BerHuLoss.forward(pred, target)."""
    if target.shape != pred.shape:
        # TODO(synk): F.interpolate(target, size=pred.shape[2:], mode='bilinear',
        # align_corners=True) has no exact JAX equivalent; kernel assumes matching shapes.
        raise ValueError("pred/target shape mismatch not supported")

    # Stream 16-bit inputs as-is (in-kernel upcast) instead of materializing f32 copies.
    if pred.dtype == target.dtype and pred.dtype in (jnp.bfloat16, jnp.float16, jnp.float32):
        p = pred.reshape(-1)
        t = target.reshape(-1)
    else:
        p = pred.astype(jnp.float32).reshape(-1)
        t = target.astype(jnp.float32).reshape(-1)

    n = p.shape[0]
    sub = 8 if p.dtype.itemsize == 4 else 16   # sublane tile of the streamed dtype

    rows = pl.cdiv(n, LANE)
    rows = max(rows, sub)                      # tiny inputs: at least one aligned block
    pad = rows * LANE - n
    if pad:
        # Rare path (ragged lane tail / tiny input). Zero padding is neutral for both
        # passes: diff == 0 and target == 0 so it is excluded from the mask and count.
        # TODO(synk): replace with an in-kernel lane mask over 1-D blocks to avoid the copy.
        p = jnp.pad(p, (0, pad))
        t = jnp.pad(t, (0, pad))
    p = p.reshape(rows, LANE)
    t = t.reshape(rows, LANE)

    # Largest sublane-aligned block <= rows; last grid block may be partial (masked).
    block_rows = min(MAX_BLOCK_ROWS, (rows // sub) * sub)
    nb_total = pl.cdiv(rows, block_rows)
    # Leading "parallel" axis: 2-way TensorCore split on v7x (~2x HBM/VPU); on 1-TC
    # chips (v5e/v6e) it is just one negligible extra outer loop level.
    nslices = 2 if nb_total >= 2 else 1
    nb_per = pl.cdiv(nb_total, nslices)
    grid = (nslices, nb_per)

    def block_idx(s, i):
        # Clamp so an uneven 2-way split never DMAs past the array; duplicated blocks
        # are skipped inside the kernels (see _dispatch).
        return (jnp.minimum(s * nb_per + i, nb_total - 1), 0)

    tile_spec = pl.BlockSpec((block_rows, LANE), block_idx)
    part_spec = pl.BlockSpec((8, LANE), lambda s, i: (s, 0))   # per-slice resident accumulator
    smem_spec = pl.BlockSpec(memory_space=pltpu.SMEM)

    # 2 inputs x 2 pipeline buffers x block + elementwise temporaries.  32 MiB covers the
    # 4096-row tiling with headroom, is above v5e's 16 MiB scoped default, and stays
    # within v7x's ~48 MiB usable per-core VMEM.
    block_bytes = block_rows * LANE * 4
    vmem_limit = max(32 << 20, 12 * block_bytes)
    cparams = pltpu.CompilerParams(
        dimension_semantics=("parallel", "arbitrary"),
        vmem_limit_bytes=vmem_limit)

    kw = dict(rows=rows, block_rows=block_rows, nb_per=nb_per,
              nb_total=nb_total, nslices=nslices)

    # --- pass 1: global max of |pred - target| -------------------------------
    max_parts = pl.pallas_call(
        functools.partial(_max_diff_kernel, **kw),
        out_shape=jax.ShapeDtypeStruct((nslices * 8, LANE), jnp.float32),
        grid=grid,
        in_specs=[tile_spec, tile_spec],
        out_specs=part_spec,
        compiler_params=cparams,
    )(p, t)

    c = jnp.float32(threshold) * jnp.max(max_parts)
    # Hoisted scalar math: c, c^2, 1/(2c).  Clamp c so 0.5/c can never be inf (the
    # all-zero-diff case never selects the quadratic branch, so the value is unchanged).
    inv_2c = jnp.float32(0.5) / jnp.maximum(c, jnp.float32(1e-30))
    params = jnp.stack([c, c * c, inv_2c]).astype(jnp.float32)

    # --- pass 2: BerHu transform + masked reductions --------------------------
    loss_parts, cnt_parts = pl.pallas_call(
        functools.partial(_berhu_sum_kernel, **kw),
        out_shape=(jax.ShapeDtypeStruct((nslices * 8, LANE), jnp.float32),
                   jax.ShapeDtypeStruct((nslices * 8, LANE), jnp.float32)),
        grid=grid,
        in_specs=[smem_spec, tile_spec, tile_spec],
        out_specs=(part_spec, part_spec),
        compiler_params=cparams,
    )(params, p, t)

    # Tiny cross-slice / cross-lane combine in the wrapper.  (f32 block-wise partials keep
    # accumulation error small; counts are exact below 2^24 per lane slot.)
    return jnp.sum(loss_parts) / (jnp.sum(cnt_parts) + 1e-8)


def berhu_loss_ref(pred, target, threshold=0.2):
    """Pure-JAX reference mirroring the PyTorch module."""
    pred = pred.astype(jnp.float32)
    target = target.astype(jnp.float32)
    diff = jnp.abs(pred - target)
    mask = (target > 0).astype(jnp.float32)
    c = threshold * jnp.max(diff)
    berhu = jnp.where(diff <= c, diff, (diff * diff + c * c) / (2.0 * c))
    return jnp.sum(berhu * mask) / (jnp.sum(mask) + 1e-8)


if __name__ == "__main__":
    key = jax.random.PRNGKey(0)
    k1, k2, k3, k4 = jax.random.split(key, 4)

    # Small NCHW depth-map-style inputs (single block, fast path).
    pred = jax.random.normal(k1, (2, 4, 16, 16), dtype=jnp.float32)
    target = jax.random.normal(k2, (2, 4, 16, 16), dtype=jnp.float32)
    out = jax.block_until_ready(berhu_loss(pred, target, threshold=0.2))
    ref = berhu_loss_ref(pred, target, threshold=0.2)
    assert jnp.allclose(out, ref, rtol=1e-5, atol=1e-6), (out, ref)

    # Shape exercising the 2-slice parallel grid and the masked partial last block.
    pred2 = jax.random.normal(k3, (2, 4, 24, 24), dtype=jnp.float32)
    target2 = jax.random.normal(k4, (2, 4, 24, 24), dtype=jnp.float32)
    out2 = jax.block_until_ready(berhu_loss(pred2, target2, threshold=0.2))
    ref2 = berhu_loss_ref(pred2, target2, threshold=0.2)
    assert jnp.allclose(out2, ref2, rtol=1e-5, atol=1e-6), (out2, ref2)

    print("KERNEL_OK")
</pallas_src>

<mosaic_0001>
module attributes {stable_mosaic.version = 11 : i64} {
  func.func @_max_diff_kernel(%arg0: i32, %arg1: i32, %arg2: memref<16x128xf32, #tpu.memory_space<vmem>>, %arg3: memref<16x128xf32, #tpu.memory_space<vmem>>, %arg4: memref<8x128xf32, #tpu.memory_space<vmem>>) attributes {dimension_semantics = [#tpu.dimension_semantics<parallel>, #tpu.dimension_semantics<arbitrary>], iteration_bounds = array<i64: 1, 1>, scalar_prefetch = 0 : i64, scratch_operands = 0 : i64, tpu.core_type = #tpu.core_type<tc>, window_params = [{transform_indices = @transform_0, window_bounds = array<i64: 16, 128>}, {transform_indices = @transform_1, window_bounds = array<i64: 16, 128>}, {transform_indices = @transform_2, window_bounds = array<i64: 8, 128>}]} {
    %c0_i32 = arith.constant 0 : i32
    %0 = arith.cmpi eq, %arg1, %c0_i32 : i32
    %1 = arith.extui %0 : i1 to i32
    %c0_i32_0 = arith.constant 0 : i32
    %2 = arith.cmpi ne, %1, %c0_i32_0 : i32
    scf.if %2 {
      %cst_8 = arith.constant 0.000000e+00 : f32
      %12 = vector.broadcast %cst_8 : f32 to vector<8x128xf32>
      %c0_9 = arith.constant 0 : index
      %c0_10 = arith.constant 0 : index
      %13 = vector.load %arg4[%c0_9, %c0_10] : memref<8x128xf32, #tpu.memory_space<vmem>>, vector<8x128xf32>
      tpu.vector_store %arg4[%c0_9, %c0_10], %12 {strides = array<i32>} : memref<8x128xf32, #tpu.memory_space<vmem>>, vector<8x128xf32>,
    } else {
    }
    %c0 = arith.constant 0 : index
    %c0_1 = arith.constant 0 : index
    %3 = vector.load %arg2[%c0, %c0_1] : memref<16x128xf32, #tpu.memory_space<vmem>>, vector<16x128xf32>
    %c0_2 = arith.constant 0 : index
    %c0_3 = arith.constant 0 : index
    %4 = vector.load %arg3[%c0_2, %c0_3] : memref<16x128xf32, #tpu.memory_space<vmem>>, vector<16x128xf32>
    %5 = arith.subf %3, %4 : vector<16x128xf32>
    %6 = math.absf %5 : vector<16x128xf32>
    %c0_4 = arith.constant 0 : index
    %c0_5 = arith.constant 0 : index
    %7 = vector.load %arg4[%c0_4, %c0_5] : memref<8x128xf32, #tpu.memory_space<vmem>>, vector<8x128xf32>
    %8 = vector.shape_cast %6 : vector<16x128xf32> to vector<2x8x128xf32>
    %cst = arith.constant dense<0xFF800000> : vector<8x128xf32>
    %9 = vector.multi_reduction <maximumf>, %8, %cst [0] : vector<2x8x128xf32> to vector<8x128xf32>
    %10 = arith.maximumf %7, %9 : vector<8x128xf32>
    %c0_6 = arith.constant 0 : index
    %c0_7 = arith.constant 0 : index
    %11 = vector.load %arg4[%c0_6, %c0_7] : memref<8x128xf32, #tpu.memory_space<vmem>>, vector<8x128xf32>
    tpu.vector_store %arg4[%c0_6, %c0_7], %10 {strides = array<i32>} : memref<8x128xf32, #tpu.memory_space<vmem>>, vector<8x128xf32>,
    return
  }
  func.func @transform_0(%arg0: i32, %arg1: i32) -> (i32, i32) {
    %c1_i32 = arith.constant 1 : i32
    %0 = arith.muli %arg0, %c1_i32 : i32
    %1 = arith.addi %0, %arg1 : i32
    %c0_i32 = arith.constant 0 : i32
    %2 = arith.minsi %1, %c0_i32 : i32
    %c0_i32_0 = arith.constant 0 : i32
    %c0_i32_1 = arith.constant 0 : i32
    return %2, %c0_i32_0 : i32, i32
  }
  func.func @transform_1(%arg0: i32, %arg1: i32) -> (i32, i32) {
    %c1_i32 = arith.constant 1 : i32
    %0 = arith.muli %arg0, %c1_i32 : i32
    %1 = arith.addi %0, %arg1 : i32
    %c0_i32 = arith.constant 0 : i32
    %2 = arith.minsi %1, %c0_i32 : i32
    %c0_i32_0 = arith.constant 0 : i32
    %c0_i32_1 = arith.constant 0 : i32
    return %2, %c0_i32_0 : i32, i32
  }
  func.func @transform_2(%arg0: i32, %arg1: i32) -> (i32, i32) {
    %c0_i32 = arith.constant 0 : i32
    %c0_i32_0 = arith.constant 0 : i32
    return %arg0, %c0_i32 : i32, i32
  }
}

</mosaic_0001>

<llo_original>
// kernel: tpu_custom_call.1
$region0: #{tpu_custom_call.1}
  #allocation0 [shape = 'u32[]', space=smem, size = 0x4, offset = 0x4, fixed_abs, tag = 'smem constant byte address 0x4 - core index']
  #allocation1 [shape = 'u32[144,128]{1,0:T(1,128)}', space=vmem, size = 0x12000, scoped, tag = 'internal scratch']
  %s0 = inlined_call_operand.hbm [shape: f32[16,128], index: 0, kind: input, shape index: {}]
  %s1 = inlined_call_operand.hbm [shape: f32[16,128], index: 1, kind: input, shape index: {}]
  %s2 = inlined_call_operand.hbm [shape: f32[8,128], index: 2, kind: output, shape index: {}]
  %s3 = sld [smem:[#allocation0]]
  $region30: #{tpu_custom_call.1} parent=0
    _
  %s5 = ssub.s32 1, %s3
  %s6 = scalar_select 0, %s5, %s3
  $region1: #{tpu_custom_call.1} parent=0
    #allocation2 [shape = 'u8[8192]{0}', space=vmem, size = 0x2000, scoped, tag = 'input window, operand 0, single buffered']
    #allocation3 [shape = 's32[1]{0}', space=sflag, size = 0x4, scoped, tag = 'scoped memory for tpu_custom_call.1']
    #allocation4 [shape = 's32[1]{0}', space=sflag, size = 0x4, scoped, tag = 'scoped memory for tpu_custom_call.1']
    #allocation5 [shape = 'u8[8192]{0}', space=vmem, size = 0x2000, scoped, tag = 'input window, operand 1, single buffered']
    #allocation6 [shape = 's32[1]{0}', space=sflag, size = 0x4, scoped, tag = 'scoped memory for tpu_custom_call.1']
    #allocation7 [shape = 'u8[4096]{0}', space=vmem, size = 0x1000, scoped, tag = 'output window, operand 0, single buffered']
    %7 = vsyncpa [#allocation3], 0
    %8 = vsyncpa [#allocation6], 0
    %9 = vsyncpa [#allocation4], 0
    // Predicated region
    $region2: #{tpu_custom_call.1} parent=1 // pred_check
      _
    $region3: #{tpu_custom_call.1} parent=1 // pred_check_branch
      %11 = sbr.rel (0) target = $region5
    $region4: #{tpu_custom_call.1} parent=1 // pred_region
      %s12 = sadd.s32 0, 0
      %p13 = scmp.lt.s32.totalorder %s12, 0
      %s14 = scalar_select %p13, %s12, 0
      %s15 = smul.u32 2, %s14
      %s17 = ssub.s32 256, 256
      %18 = vsyncadd [#allocation3], %s17
      %s19 = smul.addr %s15, 128
      %s20 = scalar_lea.hbm %s0, %s19
      %s21 = sshll.u32 [#allocation2], 4
      %s22 = int_to_ptr.vmem [resolvable:$true] %s21
      %27 = dma.hbm_to_vmem [thread:$0]  %s20, 256, %s22, [#allocation3], 128, 128, 8
    $region5: #{tpu_custom_call.1} parent=1 // pred_fallthru
      _
    // Predicated region
    $region6: #{tpu_custom_call.1} parent=1 // pred_check
      _
    $region7: #{tpu_custom_call.1} parent=1 // pred_check_branch
      %29 = sbr.rel (0) target = $region9
    $region8: #{tpu_custom_call.1} parent=1 // pred_region
      %s30 = sadd.s32 0, 0
      %p31 = scmp.lt.s32.totalorder %s30, 0
      %s32 = scalar_select %p31, %s30, 0
      %s33 = smul.u32 2, %s32
      %s35 = ssub.s32 256, 256
      %36 = vsyncadd [#allocation6], %s35
      %s37 = smul.addr %s33, 128
      %s38 = scalar_lea.hbm %s1, %s37
      %s39 = sshll.u32 [#allocation5], 4
      %s40 = int_to_ptr.vmem [resolvable:$true] %s39
      %45 = dma.hbm_to_vmem [thread:$0]  %s38, 256, %s40, [#allocation6], 128, 128, 8
    $region9: #{tpu_custom_call.1} parent=1 // pred_fallthru
      _
    // Predicated region
    $region10: #{tpu_custom_call.1} parent=1 // pred_check
      _
    $region11: #{tpu_custom_call.1} parent=1 // pred_check_branch
      %47 = sbr.rel (0) target = $region13
    $region12: #{tpu_custom_call.1} parent=1 // pred_region
      %48 = dma.done [#allocation3], 256
    $region13: #{tpu_custom_call.1} parent=1 // pred_fallthru
      _
    // Predicated region
    $region14: #{tpu_custom_call.1} parent=1 // pred_check
      _
    $region15: #{tpu_custom_call.1} parent=1 // pred_check_branch
      %50 = sbr.rel (0) target = $region17
    $region16: #{tpu_custom_call.1} parent=1 // pred_region
      %51 = dma.done [#allocation6], 256
    $region17: #{tpu_custom_call.1} parent=1 // pred_fallthru
      _
    %s52 = sadd.s32 0, 0
    %p53 = scmp.lt.s32.totalorder %s52, 0
    %s54 = scalar_select %p53, %s52, 0
    %s55 = smul.u32 2, %s54
    %s56 = sadd.s32 0, 0
    %p57 = scmp.lt.s32.totalorder %s56, 0
    %s58 = scalar_select %p57, %s56, 0
    %s59 = smul.u32 2, %s58
    %p60 = scmp.eq.s32.totalorder 0, 0
    // Predicated region
    $region18: #{tpu_custom_call.1} parent=1 // pred_check
      %p61 = pneg %p60
    $region19: #{tpu_custom_call.1} parent=1 // pred_check_branch
      %63 = sbr.rel (%p61) target = $region21
    $region20: #{tpu_custom_call.1} parent=1 // pred_region
      %64 = vst [vmem:[#allocation7] sm:$0xff] 0.0
    $region21: #{tpu_custom_call.1} parent=1 // pred_fallthru
      _
    %v65 = vld [vmem:[#allocation2] sm:$0xff]
    %v66 = vld [vmem:[#allocation2 + $0x8] sm:$0xff]
    %v67 = vld [vmem:[#allocation5] sm:$0xff]
    %v68 = vld [vmem:[#allocation5 + $0x8] sm:$0xff]
    %v69 = vsub.f32 %v65, %v67
    %v70 = vsub.f32 %v66, %v68
    %v71 = vand.u32 2147483647, %v69
    %v72 = vand.u32 2147483647, %v70
    %v73 = vld [vmem:[#allocation7] sm:$0xff]
    %v74 = vmax.f32 %v71, %v72
    %v75 = vmax.f32 %v73, %v74
    %76 = vst [vmem:[#allocation7] sm:$0xff] %v75
    // Predicated region
    $region22: #{tpu_custom_call.1} parent=1 // pred_check
      _
    $region23: #{tpu_custom_call.1} parent=1 // pred_check_branch
      %78 = sbr.rel (0) target = $region25
    $region24: #{tpu_custom_call.1} parent=1 // pred_region
      %s80 = ssub.s32 128, 128
      %81 = vsyncadd [#allocation4], %s80
      %s83 = sshll.u32 [#allocation7], 4
      %s84 = int_to_ptr.vmem [resolvable:$true] %s83
      %86 = dma.vmem_to_hbm [thread:$0]  %s84, 128, %s2, [#allocation4]
    $region25: #{tpu_custom_call.1} parent=1 // pred_fallthru
      _
    // Predicated region
    $region26: #{tpu_custom_call.1} parent=1 // pred_check
      _
    $region27: #{tpu_custom_call.1} parent=1 // pred_check_branch
      %88 = sbr.rel (0) target = $region29
    $region28: #{tpu_custom_call.1} parent=1 // pred_region
      %89 = dma.done [#allocation4], 128
    $region29: #{tpu_custom_call.1} parent=1 // pred_fallthru
      _
    %90 = vsyncpa [#allocation3], 1
    %91 = vsyncpa [#allocation6], 1
    %92 = vsyncpa [#allocation4], 1

</llo_original>
